<compile_context>
chip_gen: v7x
topology: tpu7x:2x2x1
jax: 0.10.0
libtpu: 0.0.40
codegen_flags: <defaults>
</compile_context>

<pallas_src>
import jax
import jax.numpy as jnp
from jax.experimental import pallas as pl
from jax.experimental.pallas import tpu as pltpu


def _round_up(x, m):
    return (x + m - 1) // m * m


def _edge_score_kernel(src_ref, dst_ref, ht_ref, wu_ref, wv_ref, b_ref, o_ref):
    """o = (W_u @ h[src].T + W_v @ h[dst].T + b)  for one edge tile, transposed.

    Shapes inside the kernel (TE = edge_tile, lanes; Np = padded node count):
      src_ref/dst_ref : (1, TE)   int32   edge endpoint indices
      ht_ref          : (F, Np)   f32     node features, transposed, VMEM-resident
      wu_ref/wv_ref   : (C, F)    f32     torch Linear weight halves (no transpose)
      b_ref           : (C, 1)    f32
      o_ref           : (C, TE)   f32     lane-dense score tile (transposed)
    """
    te = src_ref.shape[1]
    n_pad = ht_ref.shape[1]
    h_t = ht_ref[...]                                                  # (F, Np)
    node_ids = jax.lax.broadcasted_iota(jnp.int32, (n_pad, te), 0)     # node id per sublane

    # --- source endpoint: one-hot gather on the MXU, then project -------------
    oh_u = (node_ids == src_ref[...]).astype(jnp.float32)              # (Np, TE)
    hu_t = jnp.dot(h_t, oh_u, preferred_element_type=jnp.float32)      # (F, TE) == h[src].T
    acc = jnp.dot(wu_ref[...], hu_t, preferred_element_type=jnp.float32)   # (C, TE)

    # --- destination endpoint --------------------------------------------------
    oh_v = (node_ids == dst_ref[...]).astype(jnp.float32)
    hv_t = jnp.dot(h_t, oh_v, preferred_element_type=jnp.float32)
    acc = acc + jnp.dot(wv_ref[...], hv_t, preferred_element_type=jnp.float32)

    o_ref[...] = acc + b_ref[...]                                      # bias broadcast over lanes


def mlp_predictor_forward(h, src, dst, weight, bias, *, edge_tile=512):
    """MLPPredictor.forward.

    h:      (N, F)   node features
    src:    (E,)     edge source node index   (int32)
    dst:    (E,)     edge destination index   (int32)
    weight: (C, 2F)  torch.nn.Linear weight layout
    bias:   (C,)
    returns (E, C)   per-edge scores (float32)
    """
    N, F = h.shape
    E = int(src.shape[0])
    C = int(weight.shape[0])

    # Split Linear(concat([h_u, h_v], 1)) into its two halves, kept in torch
    # (C, F) layout because the kernel computes the transposed score tile.
    w_u = jnp.asarray(weight[:, :F], jnp.float32)          # (C, F)
    w_v = jnp.asarray(weight[:, F:], jnp.float32)          # (C, F)
    b2d = jnp.asarray(bias, jnp.float32).reshape(C, 1)     # (C, 1)

    # Node features: transpose so nodes sit on the lane axis, pad node count to
    # a sublane multiple.  Stays VMEM-resident across the whole grid.
    n_pad = _round_up(max(N, 8), 8)
    h_t = jnp.pad(jnp.asarray(h, jnp.float32), ((0, n_pad - N), (0, 0))).T  # (F, n_pad)

    # Edge indices: lane-major (1, e_pad) rows; padded edges point at node 0 and
    # their (valid but meaningless) scores are sliced off below.
    e_pad = _round_up(max(E, 1), edge_tile)
    src_row = jnp.pad(src.astype(jnp.int32), (0, e_pad - E)).reshape(1, e_pad)
    dst_row = jnp.pad(dst.astype(jnp.int32), (0, e_pad - E)).reshape(1, e_pad)

    grid = (e_pad // edge_tile,)

    # True work (advisory only): two gather matmuls + two projections per edge.
    flops = 4 * e_pad * F * (n_pad + C)
    bytes_accessed = (4 * 2 * e_pad            # int32 src/dst indices
                      + 4 * C * e_pad          # f32 output
                      + 4 * (F * n_pad + 2 * C * F + C))   # resident params

    out = pl.pallas_call(
        _edge_score_kernel,
        out_shape=jax.ShapeDtypeStruct((C, e_pad), jnp.float32),
        grid=grid,
        in_specs=[
            pl.BlockSpec((1, edge_tile), lambda i: (0, i)),   # src index tile
            pl.BlockSpec((1, edge_tile), lambda i: (0, i)),   # dst index tile
            pl.BlockSpec((F, n_pad), lambda i: (0, 0)),       # h^T : VMEM-resident
            pl.BlockSpec((C, F), lambda i: (0, 0)),           # W_u : VMEM-resident
            pl.BlockSpec((C, F), lambda i: (0, 0)),           # W_v : VMEM-resident
            pl.BlockSpec((C, 1), lambda i: (0, 0)),           # bias: VMEM-resident
        ],
        out_specs=pl.BlockSpec((C, edge_tile), lambda i: (0, i)),  # lane-dense store
        compiler_params=pltpu.CompilerParams(
            dimension_semantics=("parallel",)),
        cost_estimate=pl.CostEstimate(
            flops=flops, transcendentals=0, bytes_accessed=bytes_accessed),
    )(src_row, dst_row, h_t, w_u, w_v, b2d)

    # (C, e_pad) -> (E, C); the tiny transpose/slice is negligible XLA work.
    return out[:, :E].T


def _reference_forward(h, src, dst, weight, bias):
    """Plain-JAX reference of the PyTorch MLPPredictor semantics."""
    cat = jnp.concatenate([h[src], h[dst]], axis=1)       # (E, 2F)
    return cat @ weight.T + bias[None, :]


if __name__ == "__main__":
    # Small deterministic problem: 32 nodes, 200 edges, in_features=16, out_classes=4.
    IN_F, OUT_C = 16, 4
    N, E = 32, 200

    key = jax.random.PRNGKey(0)
    k_h, k_s, k_d, k_w, k_b = jax.random.split(key, 5)

    h = jax.random.normal(k_h, (N, IN_F), dtype=jnp.float32)
    src = jax.random.randint(k_s, (E,), 0, N, dtype=jnp.int32)
    dst = jax.random.randint(k_d, (E,), 0, N, dtype=jnp.int32)

    # torch.nn.Linear(in_features*2, out_classes) parameter layout: W (C, 2F), b (C,)
    weight = jax.random.normal(k_w, (OUT_C, 2 * IN_F), dtype=jnp.float32) * 0.1
    bias = jnp.linspace(-0.1, 0.1, OUT_C, dtype=jnp.float32)

    scores = jax.block_until_ready(mlp_predictor_forward(h, src, dst, weight, bias))
    ref = _reference_forward(h, src, dst, weight, bias)

    assert scores.shape == (E, OUT_C), scores.shape
    # f32 MXU matmuls; small slack covers multi-pass f32 accumulation differences.
    assert jnp.allclose(scores, ref, atol=2e-3, rtol=2e-3), float(
        jnp.max(jnp.abs(scores - ref)))
    print("KERNEL_OK")
</pallas_src>

<mosaic_0001>
module attributes {stable_mosaic.version = 11 : i64} {
  func.func @_edge_score_kernel(%arg0: i32, %arg1: memref<1x512xi32, #tpu.memory_space<vmem>>, %arg2: memref<1x512xi32, #tpu.memory_space<vmem>>, %arg3: memref<16x32xf32, #tpu.memory_space<vmem>>, %arg4: memref<4x16xf32, #tpu.memory_space<vmem>>, %arg5: memref<4x16xf32, #tpu.memory_space<vmem>>, %arg6: memref<4x1xf32, #tpu.memory_space<vmem>>, %arg7: memref<4x512xf32, #tpu.memory_space<vmem>>) attributes {dimension_semantics = [#tpu.dimension_semantics<parallel>], iteration_bounds = array<i64: 1>, scalar_prefetch = 0 : i64, scratch_operands = 0 : i64, tpu.core_type = #tpu.core_type<tc>, window_params = [{transform_indices = @transform_0, window_bounds = array<i64: 1, 512>}, {transform_indices = @transform_1, window_bounds = array<i64: 1, 512>}, {pipeline_mode = #tpu.pipeline_mode<synchronous>, transform_indices = @transform_2, window_bounds = array<i64: 16, 32>}, {pipeline_mode = #tpu.pipeline_mode<synchronous>, transform_indices = @transform_3, window_bounds = array<i64: 4, 16>}, {pipeline_mode = #tpu.pipeline_mode<synchronous>, transform_indices = @transform_4, window_bounds = array<i64: 4, 16>}, {pipeline_mode = #tpu.pipeline_mode<synchronous>, transform_indices = @transform_5, window_bounds = array<i64: 4, 1>}, {transform_indices = @transform_6, window_bounds = array<i64: 4, 512>}]} {
    %c0 = arith.constant 0 : index
    %c0_0 = arith.constant 0 : index
    %0 = vector.load %arg3[%c0, %c0_0] : memref<16x32xf32, #tpu.memory_space<vmem>>, vector<16x32xf32>
    %1 = tpu.iota {dimensions = array<i32: 0>} : vector<32x512xi32>
    %c0_1 = arith.constant 0 : index
    %c0_2 = arith.constant 0 : index
    %2 = vector.load %arg1[%c0_1, %c0_2] : memref<1x512xi32, #tpu.memory_space<vmem>>, vector<1x512xi32>
    %3 = vector.broadcast %2 : vector<1x512xi32> to vector<32x512xi32>
    %4 = arith.cmpi eq, %1, %3 : vector<32x512xi32>
    %5 = arith.extui %4 : vector<32x512xi1> to vector<32x512xi32>
    %6 = arith.sitofp %5 : vector<32x512xi32> to vector<32x512xf32>
    %cst = arith.constant dense<0.000000e+00> : vector<16x512xf32>
    %7 = tpu.matmul %0, %6, %cst {dimension_numbers = #tpu.dot_dimension_numbers<[1], [0], [0], [1], [0, 0, 1, 1], [], []>} : vector<16x32xf32>, vector<32x512xf32>, vector<16x512xf32> -> vector<16x512xf32>
    %c0_3 = arith.constant 0 : index
    %c0_4 = arith.constant 0 : index
    %8 = vector.load %arg4[%c0_3, %c0_4] : memref<4x16xf32, #tpu.memory_space<vmem>>, vector<4x16xf32>
    %cst_5 = arith.constant dense<0.000000e+00> : vector<4x512xf32>
    %9 = tpu.matmul %8, %7, %cst_5 {dimension_numbers = #tpu.dot_dimension_numbers<[1], [0], [0], [1], [0, 0, 1, 1], [], []>} : vector<4x16xf32>, vector<16x512xf32>, vector<4x512xf32> -> vector<4x512xf32>
    %c0_6 = arith.constant 0 : index
    %c0_7 = arith.constant 0 : index
    %10 = vector.load %arg2[%c0_6, %c0_7] : memref<1x512xi32, #tpu.memory_space<vmem>>, vector<1x512xi32>
    %11 = vector.broadcast %10 : vector<1x512xi32> to vector<32x512xi32>
    %12 = arith.cmpi eq, %1, %11 : vector<32x512xi32>
    %13 = arith.extui %12 : vector<32x512xi1> to vector<32x512xi32>
    %14 = arith.sitofp %13 : vector<32x512xi32> to vector<32x512xf32>
    %cst_8 = arith.constant dense<0.000000e+00> : vector<16x512xf32>
    %15 = tpu.matmul %0, %14, %cst_8 {dimension_numbers = #tpu.dot_dimension_numbers<[1], [0], [0], [1], [0, 0, 1, 1], [], []>} : vector<16x32xf32>, vector<32x512xf32>, vector<16x512xf32> -> vector<16x512xf32>
    %c0_9 = arith.constant 0 : index
    %c0_10 = arith.constant 0 : index
    %16 = vector.load %arg5[%c0_9, %c0_10] : memref<4x16xf32, #tpu.memory_space<vmem>>, vector<4x16xf32>
    %cst_11 = arith.constant dense<0.000000e+00> : vector<4x512xf32>
    %17 = tpu.matmul %16, %15, %cst_11 {dimension_numbers = #tpu.dot_dimension_numbers<[1], [0], [0], [1], [0, 0, 1, 1], [], []>} : vector<4x16xf32>, vector<16x512xf32>, vector<4x512xf32> -> vector<4x512xf32>
    %18 = arith.addf %9, %17 : vector<4x512xf32>
    %c0_12 = arith.constant 0 : index
    %c0_13 = arith.constant 0 : index
    %19 = vector.load %arg6[%c0_12, %c0_13] : memref<4x1xf32, #tpu.memory_space<vmem>>, vector<4x1xf32>
    %20 = vector.broadcast %19 : vector<4x1xf32> to vector<4x512xf32>
    %21 = arith.addf %18, %20 : vector<4x512xf32>
    %c0_14 = arith.constant 0 : index
    %c0_15 = arith.constant 0 : index
    %22 = vector.load %arg7[%c0_14, %c0_15] : memref<4x512xf32, #tpu.memory_space<vmem>>, vector<4x512xf32>
    tpu.vector_store %arg7[%c0_14, %c0_15], %21 {strides = array<i32>} : memref<4x512xf32, #tpu.memory_space<vmem>>, vector<4x512xf32>,
    return
  }
  func.func @transform_0(%arg0: i32) -> (i32, i32) {
    %c0_i32 = arith.constant 0 : i32
    %c0_i32_0 = arith.constant 0 : i32
    return %c0_i32, %arg0 : i32, i32
  }
  func.func @transform_1(%arg0: i32) -> (i32, i32) {
    %c0_i32 = arith.constant 0 : i32
    %c0_i32_0 = arith.constant 0 : i32
    return %c0_i32, %arg0 : i32, i32
  }
  func.func @transform_2(%arg0: i32) -> (i32, i32) {
    %c0_i32 = arith.constant 0 : i32
    %c0_i32_0 = arith.constant 0 : i32
    %c0_i32_1 = arith.constant 0 : i32
    return %c0_i32, %c0_i32_0 : i32, i32
  }
  func.func @transform_3(%arg0: i32) -> (i32, i32) {
    %c0_i32 = arith.constant 0 : i32
    %c0_i32_0 = arith.constant 0 : i32
    %c0_i32_1 = arith.constant 0 : i32
    return %c0_i32, %c0_i32_0 : i32, i32
  }
  func.func @transform_4(%arg0: i32) -> (i32, i32) {
    %c0_i32 = arith.constant 0 : i32
    %c0_i32_0 = arith.constant 0 : i32
    %c0_i32_1 = arith.constant 0 : i32
    return %c0_i32, %c0_i32_0 : i32, i32
  }
  func.func @transform_5(%arg0: i32) -> (i32, i32) {
    %c0_i32 = arith.constant 0 : i32
    %c0_i32_0 = arith.constant 0 : i32
    %c0_i32_1 = arith.constant 0 : i32
    return %c0_i32, %c0_i32_0 : i32, i32
  }
  func.func @transform_6(%arg0: i32) -> (i32, i32) {
    %c0_i32 = arith.constant 0 : i32
    %c0_i32_0 = arith.constant 0 : i32
    return %c0_i32, %arg0 : i32, i32
  }
}

</mosaic_0001>

<llo_original>
// kernel: tpu_custom_call.1
$region0: #{tpu_custom_call.1}
  #allocation0 [shape = 'u32[]', space=smem, size = 0x4, offset = 0x4, fixed_abs, tag = 'smem constant byte address 0x4 - core index']
  #allocation1 [shape = 'u32[144,128]{1,0:T(1,128)}', space=vmem, size = 0x12000, scoped, tag = 'internal scratch']
  %s0 = inlined_call_operand.vmem [shape: s32[1,512], index: 0, kind: input, shape index: {}]
  %s1 = inlined_call_operand.vmem [shape: s32[1,512], index: 1, kind: input, shape index: {}]
  %s2 = inlined_call_operand.hbm [shape: f32[16,32], index: 2, kind: input, shape index: {}]
  %s3 = inlined_call_operand.vmem [shape: f32[4,16], index: 3, kind: input, shape index: {}]
  %s4 = inlined_call_operand.vmem [shape: f32[4,16], index: 4, kind: input, shape index: {}]
  %s5 = inlined_call_operand.vmem [shape: f32[4,1], index: 5, kind: input, shape index: {}]
  %s6 = inlined_call_operand.hbm [shape: f32[4,512], index: 6, kind: output, shape index: {}]
  %s7 = sld [smem:[#allocation0]]
  $region38: #{tpu_custom_call.1} parent=0
    _
  %s9 = ssub.s32 1, %s7
  %s10 = scalar_select 0, %s9, %s7
  $region1: #{tpu_custom_call.1} parent=0
    #allocation2 [shape = 'u8[8192]{0}', space=vmem, size = 0x2000, scoped, tag = 'input window, operand 2, single buffered']
    #allocation3 [shape = 's32[1]{0}', space=sflag, size = 0x4, scoped, tag = 'scoped memory for tpu_custom_call.1']
    #allocation4 [shape = 's32[1]{0}', space=sflag, size = 0x4, scoped, tag = 'scoped memory for tpu_custom_call.1']
    #allocation5 [shape = 'u8[8192]{0}', space=vmem, size = 0x2000, scoped, tag = 'output window, operand 0, single buffered']
    %11 = vsyncpa [#allocation3], 0
    %12 = vsyncpa [#allocation4], 0
    // Predicated region
    $region2: #{tpu_custom_call.1} parent=1 // pred_check
      _
    $region3: #{tpu_custom_call.1} parent=1 // pred_check_branch
      %14 = sbr.rel (0) target = $region5
    $region4: #{tpu_custom_call.1} parent=1 // pred_region
      _
    $region5: #{tpu_custom_call.1} parent=1 // pred_fallthru
      _
    // Predicated region
    $region6: #{tpu_custom_call.1} parent=1 // pred_check
      _
    $region7: #{tpu_custom_call.1} parent=1 // pred_check_branch
      %16 = sbr.rel (0) target = $region9
    $region8: #{tpu_custom_call.1} parent=1 // pred_region
      _
    $region9: #{tpu_custom_call.1} parent=1 // pred_fallthru
      _
    // Predicated region
    $region10: #{tpu_custom_call.1} parent=1 // pred_check
      _
    $region11: #{tpu_custom_call.1} parent=1 // pred_check_branch
      %18 = sbr.rel (0) target = $region13
    $region12: #{tpu_custom_call.1} parent=1 // pred_region
      %s20 = ssub.s32 256, 256
      %21 = vsyncadd [#allocation3], %s20
      %s22 = sshll.u32 [#allocation2], 4
      %s23 = int_to_ptr.vmem [resolvable:$true] %s22
      %28 = dma.hbm_to_vmem [thread:$0]  %s2, 256, %s23, [#allocation3], 128, 128, 8
    $region13: #{tpu_custom_call.1} parent=1 // pred_fallthru
      _
    // Predicated region
    $region14: #{tpu_custom_call.1} parent=1 // pred_check
      _
    $region15: #{tpu_custom_call.1} parent=1 // pred_check_branch
      %30 = sbr.rel (0) target = $region17
    $region16: #{tpu_custom_call.1} parent=1 // pred_region
      _
    $region17: #{tpu_custom_call.1} parent=1 // pred_fallthru
      _
    // Predicated region
    $region18: #{tpu_custom_call.1} parent=1 // pred_check
      _
    $region19: #{tpu_custom_call.1} parent=1 // pred_check_branch
      %32 = sbr.rel (0) target = $region21
    $region20: #{tpu_custom_call.1} parent=1 // pred_region
      _
    $region21: #{tpu_custom_call.1} parent=1 // pred_fallthru
      _
    // Predicated region
    $region22: #{tpu_custom_call.1} parent=1 // pred_check
      _
    $region23: #{tpu_custom_call.1} parent=1 // pred_check_branch
      %34 = sbr.rel (0) target = $region25
    $region24: #{tpu_custom_call.1} parent=1 // pred_region
      _
    $region25: #{tpu_custom_call.1} parent=1 // pred_fallthru
      _
    // Predicated region
    $region26: #{tpu_custom_call.1} parent=1 // pred_check
      _
    $region27: #{tpu_custom_call.1} parent=1 // pred_check_branch
      %36 = sbr.rel (0) target = $region29
    $region28: #{tpu_custom_call.1} parent=1 // pred_region
      %37 = dma.done [#allocation3], 256
    $region29: #{tpu_custom_call.1} parent=1 // pred_fallthru
      _
    %v38 = vld [vmem:[#allocation2] sm:$0xff]
    %v39 = vld [vmem:[#allocation2 + $0x8] sm:$0xff]
    %v40 = vlaneseq
    %v41 = vshrl.u32 %v40, 7
    %v42 = vadd.s32 %v41, 8
    %v43 = vadd.s32 %v41, 16
    %v44 = vadd.s32 %v41, 24
    %v45 = vld [vmem:[%s0] sm:$0xf]
    %v46 = vlaneseq
    %v47 = vshrl.u32 %v46, 7
    %v48 = vsub.s32 0, %v47
    %v49 = vrot.slane %v45, %v48
    %v50 = vlaneseq
    %v51 = vshrl.u32 %v50, 7
    %v52 = vsub.s32 1, %v51
    %v53 = vrot.slane %v45, %v52
    %v54 = vlaneseq
    %v55 = vshrl.u32 %v54, 7
    %v56 = vsub.s32 2, %v55
    %v57 = vrot.slane %v45, %v56
    %v58 = vlaneseq
    %v59 = vshrl.u32 %v58, 7
    %v60 = vsub.s32 3, %v59
    %v61 = vrot.slane %v45, %v60
    %vm62 = vcmp.eq.s32.totalorder %v41, %v49
    %vm63 = vcmp.eq.s32.totalorder %v41, %v53
    %vm64 = vcmp.eq.s32.totalorder %v41, %v57
    %vm65 = vcmp.eq.s32.totalorder %v41, %v61
    %vm66 = vcmp.eq.s32.totalorder %v42, %v49
    %vm67 = vcmp.eq.s32.totalorder %v42, %v53
    %vm68 = vcmp.eq.s32.totalorder %v42, %v57
    %vm69 = vcmp.eq.s32.totalorder %v42, %v61
    %vm70 = vcmp.eq.s32.totalorder %v43, %v49
    %vm71 = vcmp.eq.s32.totalorder %v43, %v53
    %vm72 = vcmp.eq.s32.totalorder %v43, %v57
    %vm73 = vcmp.eq.s32.totalorder %v43, %v61
    %vm74 = vcmp.eq.s32.totalorder %v44, %v49
    %vm75 = vcmp.eq.s32.totalorder %v44, %v53
    %vm76 = vcmp.eq.s32.totalorder %v44, %v57
    %vm77 = vcmp.eq.s32.totalorder %v44, %v61
    %v78 = vsel %vm62, 1, 0
    %v79 = vsel %vm63, 1, 0
    %v80 = vsel %vm64, 1, 0
    %v81 = vsel %vm65, 1, 0
    %v82 = vsel %vm66, 1, 0
    %v83 = vsel %vm67, 1, 0
    %v84 = vsel %vm68, 1, 0
    %v85 = vsel %vm69, 1, 0
    %v86 = vsel %vm70, 1, 0
    %v87 = vsel %vm71, 1, 0
    %v88 = vsel %vm72, 1, 0
    %v89 = vsel %vm73, 1, 0
    %v90 = vsel %vm74, 1, 0
    %v91 = vsel %vm75, 1, 0
    %v92 = vsel %vm76, 1, 0
    %v93 = vsel %vm77, 1, 0
    %v94 = vcvt.s32.f32 %v78
    %v95 = vcvt.s32.f32 %v79
    %v96 = vcvt.s32.f32 %v80
    %v97 = vcvt.s32.f32 %v81
    %v98 = vcvt.s32.f32 %v82
    %v99 = vcvt.s32.f32 %v83
    %v100 = vcvt.s32.f32 %v84
    %v101 = vcvt.s32.f32 %v85
    %v102 = vcvt.s32.f32 %v86
    %v103 = vcvt.s32.f32 %v87
    %v104 = vcvt.s32.f32 %v88
    %v105 = vcvt.s32.f32 %v89
    %v106 = vcvt.s32.f32 %v90
    %v107 = vcvt.s32.f32 %v91
    %v108 = vcvt.s32.f32 %v92
    %v109 = vcvt.s32.f32 %v93
    %vm110 = vcmask 261120
    %v112 = vsel %vm110, %v38, 0
    %v115 = vsel %vm110, %v39, 0
    %117 = vmatprep.subr.mxu0 %v95
    %118 = vmatpush1.msra.mxu0 %v94
    %119 = vmatprep.subr.mxu0 %v99
    %120 = vmatpush1.msra.mxu0 %v98
    %121 = vmatprep.subr.mxu0 %v103
    %122 = vmatpush1.msra.mxu0 %v102
    %123 = vmatprep.subr.mxu0 %v107
    %124 = vmatpush1.msra.mxu0 %v106
    %125 = vmatprep.subr.mxu0 0.0
    %126 = vmatpush1.msra.mxu0 0.0
    %127 = vmatprep.subr.mxu0 0.0
    %128 = vmatpush1.msra.mxu0 0.0
    %129 = vmatprep.subr.mxu0 0.0
    %130 = vmatpush1.msra.mxu0 0.0
    %131 = vmatprep.subr.mxu0 0.0
    %132 = vmatpush1.msra.mxu0 0.0
    %133 = vmatprep.subr.mxu0 0.0
    %134 = vmatpush1.msra.mxu0 0.0
    %135 = vmatprep.subr.mxu0 0.0
    %136 = vmatpush1.msra.mxu0 0.0
    %137 = vmatprep.subr.mxu0 0.0
    %138 = vmatpush1.msra.mxu0 0.0
    %139 = vmatprep.subr.mxu0 0.0
    %140 = vmatpush1.msra.mxu0 0.0
    %141 = vmatprep.subr.mxu0 0.0
    %142 = vmatpush1.msra.mxu0 0.0
    %143 = vmatprep.subr.mxu0 0.0
    %144 = vmatpush1.msra.mxu0 0.0
    %145 = vmatprep.subr.mxu0 0.0
    %146 = vmatpush1.msra.mxu0 0.0
    %147 = vmatprep.subr.mxu0 0.0
    %148 = vmatpush1.msra.mxu0 0.0
    %149 = vmatprep.subr.mxu0 0.0
    %150 = vmatpush1.msra.mxu0 0.0
    %151 = vmatprep.subr.mxu0 0.0
    %152 = vmatpush1.msra.mxu0 0.0
    %153 = vmatprep.subr.mxu0 0.0
    %154 = vmatpush1.msra.mxu0 0.0
    %155 = vmatprep.subr.mxu0 0.0
    %156 = vmatpush1.msra.mxu0 0.0
    %157 = vmatprep.subr.mxu0 0.0
    %158 = vmatpush1.msra.mxu0 0.0
    %159 = vmatprep.subr.mxu0 0.0
    %160 = vmatpush1.msra.mxu0 0.0
    %161 = vmatprep.subr.mxu0 0.0
    %162 = vmatpush1.msra.mxu0 0.0
    %163 = vmatprep.subr.mxu0 0.0
    %164 = vmatpush1.msra.mxu0 0.0
    %165 = vmatprep.subr.mxu0 0.0
    %166 = vmatpush1.msra.mxu0 0.0
    %167 = vmatprep.subr.mxu0 0.0
    %168 = vmatpush1.msra.mxu0 0.0
    %169 = vmatprep.subr.mxu0 0.0
    %170 = vmatpush1.msra.mxu0 0.0
    %171 = vmatprep.subr.mxu0 0.0
    %172 = vmatpush1.msra.mxu0 0.0
    %173 = vmatprep.subr.mxu0 0.0
    %174 = vmatpush1.msra.mxu0 0.0
    %175 = vmatprep.subr.mxu0 0.0
    %176 = vmatpush1.msra.mxu0 0.0
    %177 = vmatprep.subr.mxu0 0.0
    %178 = vmatpush1.msra.mxu0 0.0
    %179 = vmatprep.subr.mxu0 0.0
    %180 = vmatpush1.msra.mxu0 0.0
    %181 = vmatprep.mubr.f32.mxu0 0.0
    %182 = vmatmul.mubr.f32.gmra.mrb[0].mxu0 %v112
    %v183 = vpop.f32.mrb[0].mxu0
    %v184 = vadd.f32 0.0, %v183
    %v185 = vpop.f32.mrb[0].mxu0
    %v186 = vadd.f32 0.0, %v185
    %187 = vmatprep.mubr.f32.mxu0 0.0
    %188 = vmatmul.mubr.f32.gmra.mrb[0].mxu0 %v115
    %v189 = vpop.f32.mrb[0].mxu0
    %v190 = vadd.f32 0.0, %v189
    %v191 = vpop.f32.mrb[0].mxu0
    %v192 = vadd.f32 0.0, %v191
    %193 = vdwg.mxu0
    %194 = vmatprep.subr.mxu0 %v97
    %195 = vmatpush1.msra.mxu0 %v96
    %196 = vmatprep.subr.mxu0 %v101
    %197 = vmatpush1.msra.mxu0 %v100
    %198 = vmatprep.subr.mxu0 %v105
    %199 = vmatpush1.msra.mxu0 %v104
    %200 = vmatprep.subr.mxu0 %v109
    %201 = vmatpush1.msra.mxu0 %v108
    %202 = vmatprep.subr.mxu0 0.0
    %203 = vmatpush1.msra.mxu0 0.0
    %204 = vmatprep.subr.mxu0 0.0
    %205 = vmatpush1.msra.mxu0 0.0
    %206 = vmatprep.subr.mxu0 0.0
    %207 = vmatpush1.msra.mxu0 0.0
    %208 = vmatprep.subr.mxu0 0.0
    %209 = vmatpush1.msra.mxu0 0.0
    %210 = vmatprep.subr.mxu0 0.0
    %211 = vmatpush1.msra.mxu0 0.0
    %212 = vmatprep.subr.mxu0 0.0
    %213 = vmatpush1.msra.mxu0 0.0
    %214 = vmatprep.subr.mxu0 0.0
    %215 = vmatpush1.msra.mxu0 0.0
    %216 = vmatprep.subr.mxu0 0.0
    %217 = vmatpush1.msra.mxu0 0.0
    %218 = vmatprep.subr.mxu0 0.0
    %219 = vmatpush1.msra.mxu0 0.0
    %220 = vmatprep.subr.mxu0 0.0
    %221 = vmatpush1.msra.mxu0 0.0
    %222 = vmatprep.subr.mxu0 0.0
    %223 = vmatpush1.msra.mxu0 0.0
    %224 = vmatprep.subr.mxu0 0.0
    %225 = vmatpush1.msra.mxu0 0.0
    %226 = vmatprep.subr.mxu0 0.0
    %227 = vmatpush1.msra.mxu0 0.0
    %228 = vmatprep.subr.mxu0 0.0
    %229 = vmatpush1.msra.mxu0 0.0
    %230 = vmatprep.subr.mxu0 0.0
    %231 = vmatpush1.msra.mxu0 0.0
    %232 = vmatprep.subr.mxu0 0.0
    %233 = vmatpush1.msra.mxu0 0.0
    %234 = vmatprep.subr.mxu0 0.0
    %235 = vmatpush1.msra.mxu0 0.0
    %236 = vmatprep.subr.mxu0 0.0
    %237 = vmatpush1.msra.mxu0 0.0
    %238 = vmatprep.subr.mxu0 0.0
    %239 = vmatpush1.msra.mxu0 0.0
    %240 = vmatprep.subr.mxu0 0.0
    %241 = vmatpush1.msra.mxu0 0.0
    %242 = vmatprep.subr.mxu0 0.0
    %243 = vmatpush1.msra.mxu0 0.0
    %244 = vmatprep.subr.mxu0 0.0
    %245 = vmatpush1.msra.mxu0 0.0
    %246 = vmatprep.subr.mxu0 0.0
    %247 = vmatpush1.msra.mxu0 0.0
    %248 = vmatprep.subr.mxu0 0.0
    %249 = vmatpush1.msra.mxu0 0.0
    %250 = vmatprep.subr.mxu0 0.0
    %251 = vmatpush1.msra.mxu0 0.0
    %252 = vmatprep.subr.mxu0 0.0
    %253 = vmatpush1.msra.mxu0 0.0
    %254 = vmatprep.subr.mxu0 0.0
    %255 = vmatpush1.msra.mxu0 0.0
    %256 = vmatprep.subr.mxu0 0.0
    %257 = vmatpush1.msra.mxu0 0.0
    %258 = vmatprep.mubr.f32.mxu0 0.0
    %259 = vmatmul.mubr.f32.gmra.mrb[0].mxu0 %v112
    %v260 = vpop.f32.mrb[0].mxu0
    %v261 = vadd.f32 0.0, %v260
    %v262 = vpop.f32.mrb[0].mxu0
    %v263 = vadd.f32 0.0, %v262
    %264 = vmatprep.mubr.f32.mxu0 0.0
    %265 = vmatmul.mubr.f32.gmra.mrb[0].mxu0 %v115
    %v266 = vpop.f32.mrb[0].mxu0
    %v267 = vadd.f32 0.0, %v266
    %v268 = vpop.f32.mrb[0].mxu0
    %v269 = vadd.f32 0.0, %v268
    %270 = vdwg.mxu0
    %v271 = vld [vmem:[%s3] sm:$0xf]
    %v272 = vld [vmem:[%s1] sm:$0xf]
    %v273 = vlaneseq
    %v274 = vshrl.u32 %v273, 7
    %v275 = vsub.s32 0, %v274
    %v276 = vrot.slane %v272, %v275
    %v277 = vlaneseq
    %v278 = vshrl.u32 %v277, 7
    %v279 = vsub.s32 1, %v278
    %v280 = vrot.slane %v272, %v279
    %v281 = vlaneseq
    %v282 = vshrl.u32 %v281, 7
    %v283 = vsub.s32 2, %v282
    %v284 = vrot.slane %v272, %v283
    %v285 = vlaneseq
    %v286 = vshrl.u32 %v285, 7
    %v287 = vsub.s32 3, %v286
    %v288 = vrot.slane %v272, %v287
    %vm289 = vcmp.eq.s32.totalorder %v41, %v276
    %vm290 = vcmp.eq.s32.totalorder %v41, %v280
    %vm291 = vcmp.eq.s32.totalorder %v41, %v284
    %vm292 = vcmp.eq.s32.totalorder %v41, %v288
    %vm293 = vcmp.eq.s32.totalorder %v42, %v276
    %vm294 = vcmp.eq.s32.totalorder %v42, %v280
    %vm295 = vcmp.eq.s32.totalorder %v42, %v284
    %vm296 = vcmp.eq.s32.totalorder %v42, %v288
    %vm297 = vcmp.eq.s32.totalorder %v43, %v276
    %vm298 = vcmp.eq.s32.totalorder %v43, %v280
    %vm299 = vcmp.eq.s32.totalorder %v43, %v284
    %vm300 = vcmp.eq.s32.totalorder %v43, %v288
    %vm301 = vcmp.eq.s32.totalorder %v44, %v276
    %vm302 = vcmp.eq.s32.totalorder %v44, %v280
    %vm303 = vcmp.eq.s32.totalorder %v44, %v284
    %vm304 = vcmp.eq.s32.totalorder %v44, %v288
    %v305 = vsel %vm289, 1, 0
    %v306 = vsel %vm290, 1, 0
    %v307 = vsel %vm291, 1, 0
    %v308 = vsel %vm292, 1, 0
    %v309 = vsel %vm293, 1, 0
    %v310 = vsel %vm294, 1, 0
    %v311 = vsel %vm295, 1, 0
    %v312 = vsel %vm296, 1, 0
    %v313 = vsel %vm297, 1, 0
    %v314 = vsel %vm298, 1, 0
    %v315 = vsel %vm299, 1, 0
    %v316 = vsel %vm300, 1, 0
    %v317 = vsel %vm301, 1, 0
    %v318 = vsel %vm302, 1, 0
    %v319 = vsel %vm303, 1, 0
    %v320 = vsel %vm304, 1, 0
    %v321 = vcvt.s32.f32 %v305
    %v322 = vcvt.s32.f32 %v306
    %v323 = vcvt.s32.f32 %v307
    %v324 = vcvt.s32.f32 %v308
    %v325 = vcvt.s32.f32 %v309
    %v326 = vcvt.s32.f32 %v310
    %v327 = vcvt.s32.f32 %v311
    %v328 = vcvt.s32.f32 %v312
    %v329 = vcvt.s32.f32 %v313
    %v330 = vcvt.s32.f32 %v314
    %v331 = vcvt.s32.f32 %v315
    %v332 = vcvt.s32.f32 %v316
    %v333 = vcvt.s32.f32 %v317
    %v334 = vcvt.s32.f32 %v318
    %v335 = vcvt.s32.f32 %v319
    %v336 = vcvt.s32.f32 %v320
    %337 = vmatprep.subr.mxu0 %v322
    %338 = vmatpush1.msra.mxu0 %v321
    %339 = vmatprep.subr.mxu0 %v326
    %340 = vmatpush1.msra.mxu0 %v325
    %341 = vmatprep.subr.mxu0 %v330
    %342 = vmatpush1.msra.mxu0 %v329
    %343 = vmatprep.subr.mxu0 %v334
    %344 = vmatpush1.msra.mxu0 %v333
    %345 = vmatprep.subr.mxu0 0.0
    %346 = vmatpush1.msra.mxu0 0.0
    %347 = vmatprep.subr.mxu0 0.0
    %348 = vmatpush1.msra.mxu0 0.0
    %349 = vmatprep.subr.mxu0 0.0
    %350 = vmatpush1.msra.mxu0 0.0
    %351 = vmatprep.subr.mxu0 0.0
    %352 = vmatpush1.msra.mxu0 0.0
    %353 = vmatprep.subr.mxu0 0.0
    %354 = vmatpush1.msra.mxu0 0.0
    %355 = vmatprep.subr.mxu0 0.0
    %356 = vmatpush1.msra.mxu0 0.0
    %357 = vmatprep.subr.mxu0 0.0
    %358 = vmatpush1.msra.mxu0 0.0
    %359 = vmatprep.subr.mxu0 0.0
    %360 = vmatpush1.msra.mxu0 0.0
    %361 = vmatprep.subr.mxu0 0.0
    %362 = vmatpush1.msra.mxu0 0.0
    %363 = vmatprep.subr.mxu0 0.0
    %364 = vmatpush1.msra.mxu0 0.0
    %365 = vmatprep.subr.mxu0 0.0
    %366 = vmatpush1.msra.mxu0 0.0
    %367 = vmatprep.subr.mxu0 0.0
    %368 = vmatpush1.msra.mxu0 0.0
    %369 = vmatprep.subr.mxu0 0.0
    %370 = vmatpush1.msra.mxu0 0.0
    %371 = vmatprep.subr.mxu0 0.0
    %372 = vmatpush1.msra.mxu0 0.0
    %373 = vmatprep.subr.mxu0 0.0
    %374 = vmatpush1.msra.mxu0 0.0
    %375 = vmatprep.subr.mxu0 0.0
    %376 = vmatpush1.msra.mxu0 0.0
    %377 = vmatprep.subr.mxu0 0.0
    %378 = vmatpush1.msra.mxu0 0.0
    %379 = vmatprep.subr.mxu0 0.0
    %380 = vmatpush1.msra.mxu0 0.0
    %381 = vmatprep.subr.mxu0 0.0
    %382 = vmatpush1.msra.mxu0 0.0
    %383 = vmatprep.subr.mxu0 0.0
    %384 = vmatpush1.msra.mxu0 0.0
    %385 = vmatprep.subr.mxu0 0.0
    %386 = vmatpush1.msra.mxu0 0.0
    %387 = vmatprep.subr.mxu0 0.0
    %388 = vmatpush1.msra.mxu0 0.0
    %389 = vmatprep.subr.mxu0 0.0
    %390 = vmatpush1.msra.mxu0 0.0
    %391 = vmatprep.subr.mxu0 0.0
    %392 = vmatpush1.msra.mxu0 0.0
    %393 = vmatprep.subr.mxu0 0.0
    %394 = vmatpush1.msra.mxu0 0.0
    %395 = vmatprep.subr.mxu0 0.0
    %396 = vmatpush1.msra.mxu0 0.0
    %397 = vmatprep.subr.mxu0 0.0
    %398 = vmatpush1.msra.mxu0 0.0
    %399 = vmatprep.subr.mxu0 0.0
    %400 = vmatpush1.msra.mxu0 0.0
    %401 = vmatprep.mubr.f32.mxu0 0.0
    %402 = vmatmul.mubr.f32.gmra.mrb[0].mxu0 %v112
    %v403 = vpop.f32.mrb[0].mxu0
    %v404 = vadd.f32 0.0, %v403
    %v405 = vpop.f32.mrb[0].mxu0
    %v406 = vadd.f32 0.0, %v405
    %407 = vmatprep.mubr.f32.mxu0 0.0
    %408 = vmatmul.mubr.f32.gmra.mrb[0].mxu0 %v115
    %v409 = vpop.f32.mrb[0].mxu0
    %v410 = vadd.f32 0.0, %v409
    %v411 = vpop.f32.mrb[0].mxu0
    %v412 = vadd.f32 0.0, %v411
    %413 = vdwg.mxu0
    %414 = vmatprep.subr.mxu0 %v324
    %415 = vmatpush1.msra.mxu0 %v323
    %416 = vmatprep.subr.mxu0 %v328
    %417 = vmatpush1.msra.mxu0 %v327
    %418 = vmatprep.subr.mxu0 %v332
    %419 = vmatpush1.msra.mxu0 %v331
    %420 = vmatprep.subr.mxu0 %v336
    %421 = vmatpush1.msra.mxu0 %v335
    %422 = vmatprep.subr.mxu0 0.0
    %423 = vmatpush1.msra.mxu0 0.0
    %424 = vmatprep.subr.mxu0 0.0
    %425 = vmatpush1.msra.mxu0 0.0
    %426 = vmatprep.subr.mxu0 0.0
    %427 = vmatpush1.msra.mxu0 0.0
    %428 = vmatprep.subr.mxu0 0.0
    %429 = vmatpush1.msra.mxu0 0.0
    %430 = vmatprep.subr.mxu0 0.0
    %431 = vmatpush1.msra.mxu0 0.0
    %432 = vmatprep.subr.mxu0 0.0
    %433 = vmatpush1.msra.mxu0 0.0
    %434 = vmatprep.subr.mxu0 0.0
    %435 = vmatpush1.msra.mxu0 0.0
    %436 = vmatprep.subr.mxu0 0.0
    %437 = vmatpush1.msra.mxu0 0.0
    %438 = vmatprep.subr.mxu0 0.0
    %439 = vmatpush1.msra.mxu0 0.0
    %440 = vmatprep.subr.mxu0 0.0
    %441 = vmatpush1.msra.mxu0 0.0
    %442 = vmatprep.subr.mxu0 0.0
    %443 = vmatpush1.msra.mxu0 0.0
    %444 = vmatprep.subr.mxu0 0.0
    %445 = vmatpush1.msra.mxu0 0.0
    %446 = vmatprep.subr.mxu0 0.0
    %447 = vmatpush1.msra.mxu0 0.0
    %448 = vmatprep.subr.mxu0 0.0
    %449 = vmatpush1.msra.mxu0 0.0
    %450 = vmatprep.subr.mxu0 0.0
    %451 = vmatpush1.msra.mxu0 0.0
    %452 = vmatprep.subr.mxu0 0.0
    %453 = vmatpush1.msra.mxu0 0.0
    %454 = vmatprep.subr.mxu0 0.0
    %455 = vmatpush1.msra.mxu0 0.0
    %456 = vmatprep.subr.mxu0 0.0
    %457 = vmatpush1.msra.mxu0 0.0
    %458 = vmatprep.subr.mxu0 0.0
    %459 = vmatpush1.msra.mxu0 0.0
    %460 = vmatprep.subr.mxu0 0.0
    %461 = vmatpush1.msra.mxu0 0.0
    %462 = vmatprep.subr.mxu0 0.0
    %463 = vmatpush1.msra.mxu0 0.0
    %464 = vmatprep.subr.mxu0 0.0
    %465 = vmatpush1.msra.mxu0 0.0
    %466 = vmatprep.subr.mxu0 0.0
    %467 = vmatpush1.msra.mxu0 0.0
    %468 = vmatprep.subr.mxu0 0.0
    %469 = vmatpush1.msra.mxu0 0.0
    %470 = vmatprep.subr.mxu0 0.0
    %471 = vmatpush1.msra.mxu0 0.0
    %472 = vmatprep.subr.mxu0 0.0
    %473 = vmatpush1.msra.mxu0 0.0
    %474 = vmatprep.subr.mxu0 0.0
    %475 = vmatpush1.msra.mxu0 0.0
    %476 = vmatprep.subr.mxu0 0.0
    %477 = vmatpush1.msra.mxu0 0.0
    %478 = vmatprep.mubr.f32.mxu0 0.0
    %479 = vmatmul.mubr.f32.gmra.mrb[0].mxu0 %v112
    %v480 = vpop.f32.mrb[0].mxu0
    %v481 = vadd.f32 0.0, %v480
    %v482 = vpop.f32.mrb[0].mxu0
    %v483 = vadd.f32 0.0, %v482
    %484 = vmatprep.mubr.f32.mxu0 0.0
    %485 = vmatmul.mubr.f32.gmra.mrb[0].mxu0 %v115
    %v486 = vpop.f32.mrb[0].mxu0
    %v487 = vadd.f32 0.0, %v486
    %v488 = vpop.f32.mrb[0].mxu0
    %v489 = vadd.f32 0.0, %v488
    %490 = vdwg.mxu0
    %v491 = vld [vmem:[%s4] sm:$0xf]
    %vm492 = vcmask 130048
    %v494 = vsel %vm492, %v491, 0
    %496 = vmatprep.subr.mxu0 %v406
    %497 = vmatpush1.msra.mxu0 %v404
    %498 = vmatprep.subr.mxu0 %v412
    %499 = vmatpush1.msra.mxu0 %v410
    %500 = vmatprep.subr.mxu0 0.0
    %501 = vmatpush1.msra.mxu0 0.0
    %502 = vmatprep.subr.mxu0 0.0
    %503 = vmatpush1.msra.mxu0 0.0
    %504 = vmatprep.subr.mxu0 0.0
    %505 = vmatpush1.msra.mxu0 0.0
    %506 = vmatprep.subr.mxu0 0.0
    %507 = vmatpush1.msra.mxu0 0.0
    %508 = vmatprep.subr.mxu0 0.0
    %509 = vmatpush1.msra.mxu0 0.0
    %510 = vmatprep.subr.mxu0 0.0
    %511 = vmatpush1.msra.mxu0 0.0
    %512 = vmatprep.subr.mxu0 0.0
    %513 = vmatpush1.msra.mxu0 0.0
    %514 = vmatprep.subr.mxu0 0.0
    %515 = vmatpush1.msra.mxu0 0.0
    %516 = vmatprep.subr.mxu0 0.0
    %517 = vmatpush1.msra.mxu0 0.0
    %518 = vmatprep.subr.mxu0 0.0
    %519 = vmatpush1.msra.mxu0 0.0
    %520 = vmatprep.subr.mxu0 0.0
    %521 = vmatpush1.msra.mxu0 0.0
    %522 = vmatprep.subr.mxu0 0.0
    %523 = vmatpush1.msra.mxu0 0.0
    %524 = vmatprep.subr.mxu0 0.0
    %525 = vmatpush1.msra.mxu0 0.0
    %526 = vmatprep.subr.mxu0 0.0
    %527 = vmatpush1.msra.mxu0 0.0
    %528 = vmatprep.subr.mxu0 0.0
    %529 = vmatpush1.msra.mxu0 0.0
    %530 = vmatprep.subr.mxu0 0.0
    %531 = vmatpush1.msra.mxu0 0.0
    %532 = vmatprep.subr.mxu0 0.0
    %533 = vmatpush1.msra.mxu0 0.0
    %534 = vmatprep.subr.mxu0 0.0
    %535 = vmatpush1.msra.mxu0 0.0
    %536 = vmatprep.subr.mxu0 0.0
    %537 = vmatpush1.msra.mxu0 0.0
    %538 = vmatprep.subr.mxu0 0.0
    %539 = vmatpush1.msra.mxu0 0.0
    %540 = vmatprep.subr.mxu0 0.0
    %541 = vmatpush1.msra.mxu0 0.0
    %542 = vmatprep.subr.mxu0 0.0
    %543 = vmatpush1.msra.mxu0 0.0
    %544 = vmatprep.subr.mxu0 0.0
    %545 = vmatpush1.msra.mxu0 0.0
    %546 = vmatprep.subr.mxu0 0.0
    %547 = vmatpush1.msra.mxu0 0.0
    %548 = vmatprep.subr.mxu0 0.0
    %549 = vmatpush1.msra.mxu0 0.0
    %550 = vmatprep.subr.mxu0 0.0
    %551 = vmatpush1.msra.mxu0 0.0
    %552 = vmatprep.subr.mxu0 0.0
    %553 = vmatpush1.msra.mxu0 0.0
    %554 = vmatprep.subr.mxu0 0.0
    %555 = vmatpush1.msra.mxu0 0.0
    %556 = vmatprep.subr.mxu0 0.0
    %557 = vmatpush1.msra.mxu0 0.0
    %558 = vmatprep.subr.mxu0 0.0
    %559 = vmatpush1.msra.mxu0 0.0
    %560 = vmatprep.mubr.f32.mxu0 0.0
    %561 = vmatmul.mubr.f32.gmra.mrb[0].mxu0 %v494
    %v562 = vpop.f32.mrb[0].mxu0
    %v563 = vadd.f32 0.0, %v562
    %v564 = vpop.f32.mrb[0].mxu0
    %v565 = vadd.f32 0.0, %v564
    %566 = vdwg.mxu0
    %567 = vmatprep.subr.mxu0 %v483
    %568 = vmatpush1.msra.mxu0 %v481
    %569 = vmatprep.subr.mxu0 %v489
    %570 = vmatpush1.msra.mxu0 %v487
    %571 = vmatprep.subr.mxu0 0.0
    %572 = vmatpush1.msra.mxu0 0.0
    %573 = vmatprep.subr.mxu0 0.0
    %574 = vmatpush1.msra.mxu0 0.0
    %575 = vmatprep.subr.mxu0 0.0
    %576 = vmatpush1.msra.mxu0 0.0
    %577 = vmatprep.subr.mxu0 0.0
    %578 = vmatpush1.msra.mxu0 0.0
    %579 = vmatprep.subr.mxu0 0.0
    %580 = vmatpush1.msra.mxu0 0.0
    %581 = vmatprep.subr.mxu0 0.0
    %582 = vmatpush1.msra.mxu0 0.0
    %583 = vmatprep.subr.mxu0 0.0
    %584 = vmatpush1.msra.mxu0 0.0
    %585 = vmatprep.subr.mxu0 0.0
    %586 = vmatpush1.msra.mxu0 0.0
    %587 = vmatprep.subr.mxu0 0.0
    %588 = vmatpush1.msra.mxu0 0.0
    %589 = vmatprep.subr.mxu0 0.0
    %590 = vmatpush1.msra.mxu0 0.0
    %591 = vmatprep.subr.mxu0 0.0
    %592 = vmatpush1.msra.mxu0 0.0
    %593 = vmatprep.subr.mxu0 0.0
    %594 = vmatpush1.msra.mxu0 0.0
    %595 = vmatprep.subr.mxu0 0.0
    %596 = vmatpush1.msra.mxu0 0.0
    %597 = vmatprep.subr.mxu0 0.0
    %598 = vmatpush1.msra.mxu0 0.0
    %599 = vmatprep.subr.mxu0 0.0
    %600 = vmatpush1.msra.mxu0 0.0
    %601 = vmatprep.subr.mxu0 0.0
    %602 = vmatpush1.msra.mxu0 0.0
    %603 = vmatprep.subr.mxu0 0.0
    %604 = vmatpush1.msra.mxu0 0.0
    %605 = vmatprep.subr.mxu0 0.0
    %606 = vmatpush1.msra.mxu0 0.0
    %607 = vmatprep.subr.mxu0 0.0
    %608 = vmatpush1.msra.mxu0 0.0
    %609 = vmatprep.subr.mxu0 0.0
    %610 = vmatpush1.msra.mxu0 0.0
    %611 = vmatprep.subr.mxu0 0.0
    %612 = vmatpush1.msra.mxu0 0.0
    %613 = vmatprep.subr.mxu0 0.0
    %614 = vmatpush1.msra.mxu0 0.0
    %615 = vmatprep.subr.mxu0 0.0
    %616 = vmatpush1.msra.mxu0 0.0
    %617 = vmatprep.subr.mxu0 0.0
    %618 = vmatpush1.msra.mxu0 0.0
    %619 = vmatprep.subr.mxu0 0.0
    %620 = vmatpush1.msra.mxu0 0.0
    %621 = vmatprep.subr.mxu0 0.0
    %622 = vmatpush1.msra.mxu0 0.0
    %623 = vmatprep.subr.mxu0 0.0
    %624 = vmatpush1.msra.mxu0 0.0
    %625 = vmatprep.subr.mxu0 0.0
    %626 = vmatpush1.msra.mxu0 0.0
    %627 = vmatprep.subr.mxu0 0.0
    %628 = vmatpush1.msra.mxu0 0.0
    %629 = vmatprep.subr.mxu0 0.0
    %630 = vmatpush1.msra.mxu0 0.0
    %631 = vmatprep.mubr.f32.mxu0 0.0
    %632 = vmatmul.mubr.f32.gmra.mrb[0].mxu0 %v494
    %v633 = vpop.f32.mrb[0].mxu0
    %v634 = vadd.f32 0.0, %v633
    %v635 = vpop.f32.mrb[0].mxu0
    %v636 = vadd.f32 0.0, %v635
    %637 = vdwg.mxu0
    %v639 = vsel %vm492, %v271, 0
    %641 = vmatprep.subr.mxu0 %v186
    %642 = vmatpush1.msra.mxu0 %v184
    %643 = vmatprep.subr.mxu0 %v192
    %644 = vmatpush1.msra.mxu0 %v190
    %645 = vmatprep.subr.mxu0 0.0
    %646 = vmatpush1.msra.mxu0 0.0
    %647 = vmatprep.subr.mxu0 0.0
    %648 = vmatpush1.msra.mxu0 0.0
    %649 = vmatprep.subr.mxu0 0.0
    %650 = vmatpush1.msra.mxu0 0.0
    %651 = vmatprep.subr.mxu0 0.0
    %652 = vmatpush1.msra.mxu0 0.0
    %653 = vmatprep.subr.mxu0 0.0
    %654 = vmatpush1.msra.mxu0 0.0
    %655 = vmatprep.subr.mxu0 0.0
    %656 = vmatpush1.msra.mxu0 0.0
    %657 = vmatprep.subr.mxu0 0.0
    %658 = vmatpush1.msra.mxu0 0.0
    %659 = vmatprep.subr.mxu0 0.0
    %660 = vmatpush1.msra.mxu0 0.0
    %661 = vmatprep.subr.mxu0 0.0
    %662 = vmatpush1.msra.mxu0 0.0
    %663 = vmatprep.subr.mxu0 0.0
    %664 = vmatpush1.msra.mxu0 0.0
    %665 = vmatprep.subr.mxu0 0.0
    %666 = vmatpush1.msra.mxu0 0.0
    %667 = vmatprep.subr.mxu0 0.0
    %668 = vmatpush1.msra.mxu0 0.0
    %669 = vmatprep.subr.mxu0 0.0
    %670 = vmatpush1.msra.mxu0 0.0
    %671 = vmatprep.subr.mxu0 0.0
    %672 = vmatpush1.msra.mxu0 0.0
    %673 = vmatprep.subr.mxu0 0.0
    %674 = vmatpush1.msra.mxu0 0.0
    %675 = vmatprep.subr.mxu0 0.0
    %676 = vmatpush1.msra.mxu0 0.0
    %677 = vmatprep.subr.mxu0 0.0
    %678 = vmatpush1.msra.mxu0 0.0
    %679 = vmatprep.subr.mxu0 0.0
    %680 = vmatpush1.msra.mxu0 0.0
    %681 = vmatprep.subr.mxu0 0.0
    %682 = vmatpush1.msra.mxu0 0.0
    %683 = vmatprep.subr.mxu0 0.0
    %684 = vmatpush1.msra.mxu0 0.0
    %685 = vmatprep.subr.mxu0 0.0
    %686 = vmatpush1.msra.mxu0 0.0
    %687 = vmatprep.subr.mxu0 0.0
    %688 = vmatpush1.msra.mxu0 0.0
    %689 = vmatprep.subr.mxu0 0.0
    %690 = vmatpush1.msra.mxu0 0.0
    %691 = vmatprep.subr.mxu0 0.0
    %692 = vmatpush1.msra.mxu0 0.0
    %693 = vmatprep.subr.mxu0 0.0
    %694 = vmatpush1.msra.mxu0 0.0
    %695 = vmatprep.subr.mxu0 0.0
    %696 = vmatpush1.msra.mxu0 0.0
    %697 = vmatprep.subr.mxu0 0.0
    %698 = vmatpush1.msra.mxu0 0.0
    %699 = vmatprep.subr.mxu0 0.0
    %700 = vmatpush1.msra.mxu0 0.0
    %701 = vmatprep.subr.mxu0 0.0
    %702 = vmatpush1.msra.mxu0 0.0
    %703 = vmatprep.subr.mxu0 0.0
    %704 = vmatpush1.msra.mxu0 0.0
    %705 = vmatprep.mubr.f32.mxu0 0.0
    %706 = vmatmul.mubr.f32.gmra.mrb[0].mxu0 %v639
    %v707 = vpop.f32.mrb[0].mxu0
    %v708 = vadd.f32 %v563, %v707
    %v709 = vpop.f32.mrb[0].mxu0
    %v710 = vadd.f32 %v565, %v709
    %711 = vdwg.mxu0
    %712 = vmatprep.subr.mxu0 %v263
    %713 = vmatpush1.msra.mxu0 %v261
    %714 = vmatprep.subr.mxu0 %v269
    %715 = vmatpush1.msra.mxu0 %v267
    %716 = vmatprep.subr.mxu0 0.0
    %717 = vmatpush1.msra.mxu0 0.0
    %718 = vmatprep.subr.mxu0 0.0
    %719 = vmatpush1.msra.mxu0 0.0
    %720 = vmatprep.subr.mxu0 0.0
    %721 = vmatpush1.msra.mxu0 0.0
    %722 = vmatprep.subr.mxu0 0.0
    %723 = vmatpush1.msra.mxu0 0.0
    %724 = vmatprep.subr.mxu0 0.0
    %725 = vmatpush1.msra.mxu0 0.0
    %726 = vmatprep.subr.mxu0 0.0
    %727 = vmatpush1.msra.mxu0 0.0
    %728 = vmatprep.subr.mxu0 0.0
    %729 = vmatpush1.msra.mxu0 0.0
    %730 = vmatprep.subr.mxu0 0.0
    %731 = vmatpush1.msra.mxu0 0.0
    %732 = vmatprep.subr.mxu0 0.0
    %733 = vmatpush1.msra.mxu0 0.0
    %734 = vmatprep.subr.mxu0 0.0
    %735 = vmatpush1.msra.mxu0 0.0
    %736 = vmatprep.subr.mxu0 0.0
    %737 = vmatpush1.msra.mxu0 0.0
    %738 = vmatprep.subr.mxu0 0.0
    %739 = vmatpush1.msra.mxu0 0.0
    %740 = vmatprep.subr.mxu0 0.0
    %741 = vmatpush1.msra.mxu0 0.0
    %742 = vmatprep.subr.mxu0 0.0
    %743 = vmatpush1.msra.mxu0 0.0
    %744 = vmatprep.subr.mxu0 0.0
    %745 = vmatpush1.msra.mxu0 0.0
    %746 = vmatprep.subr.mxu0 0.0
    %747 = vmatpush1.msra.mxu0 0.0
    %748 = vmatprep.subr.mxu0 0.0
    %749 = vmatpush1.msra.mxu0 0.0
    %750 = vmatprep.subr.mxu0 0.0
    %751 = vmatpush1.msra.mxu0 0.0
    %752 = vmatprep.subr.mxu0 0.0
    %753 = vmatpush1.msra.mxu0 0.0
    %754 = vmatprep.subr.mxu0 0.0
    %755 = vmatpush1.msra.mxu0 0.0
    %756 = vmatprep.subr.mxu0 0.0
    %757 = vmatpush1.msra.mxu0 0.0
    %758 = vmatprep.subr.mxu0 0.0
    %759 = vmatpush1.msra.mxu0 0.0
    %760 = vmatprep.subr.mxu0 0.0
    %761 = vmatpush1.msra.mxu0 0.0
    %762 = vmatprep.subr.mxu0 0.0
    %763 = vmatpush1.msra.mxu0 0.0
    %764 = vmatprep.subr.mxu0 0.0
    %765 = vmatpush1.msra.mxu0 0.0
    %766 = vmatprep.subr.mxu0 0.0
    %767 = vmatpush1.msra.mxu0 0.0
    %768 = vmatprep.subr.mxu0 0.0
    %769 = vmatpush1.msra.mxu0 0.0
    %770 = vmatprep.subr.mxu0 0.0
    %771 = vmatpush1.msra.mxu0 0.0
    %772 = vmatprep.subr.mxu0 0.0
    %773 = vmatpush1.msra.mxu0 0.0
    %774 = vmatprep.subr.mxu0 0.0
    %775 = vmatpush1.msra.mxu0 0.0
    %776 = vmatprep.mubr.f32.mxu0 0.0
    %777 = vmatmul.mubr.f32.gmra.mrb[0].mxu0 %v639
    %v778 = vpop.f32.mrb[0].mxu0
    %v779 = vadd.f32 %v634, %v778
    %v780 = vpop.f32.mrb[0].mxu0
    %v781 = vadd.f32 %v636, %v780
    %782 = vdwg.mxu0
    %v783 = vld [vmem:[%s5] sm:$0xf]
    %785 = vset.pattern.permute.xlu0 0
    %786 = vperm.xlu0 %785, %v783
    %v787 = vpop.permute.xlu0 %786
    %v789 = vadd.f32 %v708, %v787
    %v790 = vadd.f32 %v710, %v787
    %v791 = vadd.f32 %v779, %v787
    %v792 = vadd.f32 %v781, %v787
    %v797 = vcombine.low %v789, %v790
    %v798 = vcombine.low %v791, %v792
    %801 = vst [vmem:[#allocation5] sm:$0xff] %v797
    %802 = vst [vmem:[#allocation5 + $0x8] sm:$0xff] %v798
    // Predicated region
    $region30: #{tpu_custom_call.1} parent=1 // pred_check
      _
    $region31: #{tpu_custom_call.1} parent=1 // pred_check_branch
      %804 = sbr.rel (0) target = $region33
    $region32: #{tpu_custom_call.1} parent=1 // pred_region
      %s806 = ssub.s32 256, 256
      %807 = vsyncadd [#allocation4], %s806
      %s809 = sshll.u32 [#allocation5], 4
      %s810 = int_to_ptr.vmem [resolvable:$true] %s809
      %812 = dma.vmem_to_hbm [thread:$0]  %s810, 256, %s6, [#allocation4]
    $region33: #{tpu_custom_call.1} parent=1 // pred_fallthru
      _
    // Predicated region
    $region34: #{tpu_custom_call.1} parent=1 // pred_check
      _
    $region35: #{tpu_custom_call.1} parent=1 // pred_check_branch
      %814 = sbr.rel (0) target = $region37
    $region36: #{tpu_custom_call.1} parent=1 // pred_region
      %815 = dma.done [#allocation4], 256
    $region37: #{tpu_custom_call.1} parent=1 // pred_fallthru
      _
    %816 = vsyncpa [#allocation3], 1
    %817 = vsyncpa [#allocation4], 1

</llo_original>
